<compile_context>
chip_gen: v7x
topology: tpu7x:2x2x1
jax: 0.10.0
libtpu: 0.0.40
codegen_flags: <defaults>
</compile_context>

<pallas_src>
import math

import jax
import jax.numpy as jnp
from jax.experimental import pallas as pl
from jax.experimental.pallas import tpu as pltpu


def _resolve_tile_b(B: int, tile_b=None, cap: int = 512) -> int:
    """Pick a batch tile: divides B and is sublane-aligned (mult of 8) unless
    it covers the whole batch."""
    if tile_b is None:
        tile_b = B
        if B > cap:
            for t in range(cap, 7, -1):
                if B % t == 0 and t % 8 == 0:
                    tile_b = t
                    break
    assert B % tile_b == 0, "batch tile must divide batch"
    assert tile_b == B or tile_b % 8 == 0, "partial batch tiles must be multiples of 8"
    return tile_b


_PARALLEL = pltpu.CompilerParams(dimension_semantics=("parallel",))


# ---------------------------------------------------------------------------
# AggMode.Mean:  sum over neighbor / visible_neighbors_count   (or max)
# ---------------------------------------------------------------------------
def mean_aggregate(x, counts, actual_mode="mean", tile_b=None):
    # x: (B, N, F) float32, counts: (B, 1) float32  ->  (B, F)
    B, N, F = x.shape
    tb = _resolve_tile_b(B, tile_b)

    def kernel(x_ref, cnt_ref, o_ref):
        if actual_mode == "mean":
            s = jnp.sum(x_ref[...], axis=1)                              # (tb, F)
            # NOTE: like the torch module, counts==0 would give inf/nan.
            o_ref[...] = s * pl.reciprocal(cnt_ref[...], approx=True)    # EUP recip
        else:  # 'max'
            o_ref[...] = jnp.max(x_ref[...], axis=1)

    return pl.pallas_call(
        kernel,
        out_shape=jax.ShapeDtypeStruct((B, F), x.dtype),
        grid=(B // tb,),
        in_specs=[
            pl.BlockSpec((tb, N, F), lambda i: (i, 0, 0)),
            pl.BlockSpec((tb, 1), lambda i: (i, 0)),
        ],
        out_specs=pl.BlockSpec((tb, F), lambda i: (i, 0)),
        compiler_params=_PARALLEL,
    )(x, counts)


# ---------------------------------------------------------------------------
# AggMode.Bayesian (separate=False, output_variance=True, rectifier=exp)
# ---------------------------------------------------------------------------
def bayesian_aggregate(x, sigma_z_0_sq, mean_z_0, tile_b=None):
    # x: (B, N, 2F) with feature interleaved as (mean_0, rawcov_0, mean_1, ...)
    # sigma_z_0_sq, mean_z_0: (1, F)  ->  output (B, 2F) = [mean_z | sigma_z_sq]
    B, N, F2 = x.shape
    F = F2 // 2
    tb = _resolve_tile_b(B, tile_b)

    def kernel(x_ref, sig0_ref, mu0_ref, o_ref):
        x2 = x_ref[...].reshape(tb * N, 2 * F)
        # In-kernel de-interleave via exact 0/1 selection matmuls (tiny MXU op):
        # avoids the wrapper-side strided-copy HBM pass and lane relayouts.
        c = jax.lax.broadcasted_iota(jnp.int32, (2 * F, F), 0)
        f = jax.lax.broadcasted_iota(jnp.int32, (2 * F, F), 1)
        sel_mean = (c == 2 * f).astype(x2.dtype)
        sel_cov = (c == 2 * f + 1).astype(x2.dtype)
        r = jnp.dot(x2, sel_mean, preferred_element_type=jnp.float32).reshape(tb, N, F)
        cov_raw = jnp.dot(x2, sel_cov, preferred_element_type=jnp.float32).reshape(tb, N, F)

        inv_cov = jnp.exp(-cov_raw)            # == 1 / exp(cov_raw): one EUP op, no divide
        inv_sig0 = jnp.exp(-sig0_ref[...])     # == 1 / exp(sigma_z_0_sq), (1, F)
        mu0 = mu0_ref[...]                     # (1, F)

        denom = inv_sig0 + jnp.sum(inv_cov, axis=1)                    # (tb, F)
        sigma_z_sq = pl.reciprocal(denom, approx=True)                 # EUP recip
        num = jnp.sum((r - mu0[:, None, :]) * inv_cov, axis=1)         # (tb, F)
        mean_z = mu0 + sigma_z_sq * num

        # output_variance=True -> concat along feature, written as two slabs
        o_ref[:, :F] = mean_z
        o_ref[:, F:] = sigma_z_sq

    return pl.pallas_call(
        kernel,
        out_shape=jax.ShapeDtypeStruct((B, 2 * F), x.dtype),
        grid=(B // tb,),
        in_specs=[
            pl.BlockSpec((tb, N, 2 * F), lambda i: (i, 0, 0)),
            pl.BlockSpec((1, F), lambda i: (0, 0)),
            pl.BlockSpec((1, F), lambda i: (0, 0)),
        ],
        out_specs=pl.BlockSpec((tb, 2 * F), lambda i: (i, 0)),
        compiler_params=_PARALLEL,
    )(x, sigma_z_0_sq, mean_z_0)


# ---------------------------------------------------------------------------
# AggMode.MultiHeadAttention: self-attention (residual) then mean over neighbor
# ---------------------------------------------------------------------------
def mha_aggregate(x, counts, w_in, b_in, w_out, b_out, num_heads, tile_b=None):
    # x: (B, N, E), counts: (B, 1)
    # w_in: (3E, E), b_in: (1, 3E), w_out: (E, E), b_out: (1, E)  (torch Linear layout)
    B, N, E = x.shape
    H = num_heads
    Dh = E // H
    scale = 1.0 / math.sqrt(Dh)
    tb = _resolve_tile_b(B, tile_b)

    # glue: pre-transpose projection weights so the kernel does plain x @ W^T
    w_in_t = jnp.transpose(w_in)    # (E, 3E)
    w_out_t = jnp.transpose(w_out)  # (E, E)

    def kernel(x_ref, cnt_ref, w_in_ref, b_in_ref, w_out_ref, b_out_ref, o_ref):
        x_ = x_ref[...]                                    # (tb, N, E)
        x2 = x_.reshape(tb * N, E)
        # fused qkv projection (single in_proj like nn.MultiheadAttention)
        qkv = jnp.dot(x2, w_in_ref[...],
                      preferred_element_type=jnp.float32) + b_in_ref[...]   # (tb*N, 3E)
        w_out_full = w_out_ref[...]                        # (E, E)

        out2 = jnp.zeros((tb * N, E), dtype=jnp.float32)
        for h in range(H):                                 # static unroll over heads
            qh = qkv[:, 0 * E + h * Dh:0 * E + (h + 1) * Dh].reshape(tb, N, Dh)
            kh = qkv[:, 1 * E + h * Dh:1 * E + (h + 1) * Dh].reshape(tb, N, Dh)
            vh = qkv[:, 2 * E + h * Dh:2 * E + (h + 1) * Dh].reshape(tb, N, Dh)
            s = jnp.einsum('bnd,bmd->bnm', qh, kh,
                           preferred_element_type=jnp.float32) * scale       # (tb, N, N)
            s = s - jnp.max(s, axis=-1, keepdims=True)
            p = jnp.exp(s)
            p = p * pl.reciprocal(jnp.sum(p, axis=-1, keepdims=True), approx=True)
            oh = jnp.einsum('bnm,bmd->bnd', p, vh,
                            preferred_element_type=jnp.float32)              # (tb, N, Dh)
            # fold this head's slab of the output projection (replaces the
            # lane-axis concat of head outputs)
            out2 = out2 + jnp.dot(oh.reshape(tb * N, Dh),
                                  w_out_full[h * Dh:(h + 1) * Dh, :],
                                  preferred_element_type=jnp.float32)
        out = (out2 + b_out_ref[...]).reshape(tb, N, E) + x_   # residual=True
        # Aggregate: sum over neighbor / visible_neighbors_count
        o_ref[...] = jnp.sum(out, axis=1) * pl.reciprocal(cnt_ref[...], approx=True)

    return pl.pallas_call(
        kernel,
        out_shape=jax.ShapeDtypeStruct((B, E), x.dtype),
        grid=(B // tb,),
        in_specs=[
            pl.BlockSpec((tb, N, E), lambda i: (i, 0, 0)),
            pl.BlockSpec((tb, 1), lambda i: (i, 0)),
            pl.BlockSpec((E, 3 * E), lambda i: (0, 0)),
            pl.BlockSpec((1, 3 * E), lambda i: (0, 0)),
            pl.BlockSpec((E, E), lambda i: (0, 0)),
            pl.BlockSpec((1, E), lambda i: (0, 0)),
        ],
        out_specs=pl.BlockSpec((tb, E), lambda i: (i, 0)),
        compiler_params=_PARALLEL,
    )(x, counts, w_in_t, b_in, w_out_t, b_out)


if __name__ == "__main__":
    B, N, F, H = 16, 8, 32, 4     # batch, neighbors, latent_embedding_dim, heads
    TILE_B = 8                    # two batch tiles -> exercises pipelining + megacore
    key = jax.random.PRNGKey(0)
    k1, k2, k3, k4, k5 = jax.random.split(key, 5)

    # visible_neighbors_count (all neighbors visible here)
    counts = jnp.full((B, 1), float(N), dtype=jnp.float32)

    # --- Mean mode ---
    x_mean = jax.random.normal(k1, (B, N, F), dtype=jnp.float32)
    out_mean = mean_aggregate(x_mean, counts, actual_mode="mean", tile_b=TILE_B)
    out_max = mean_aggregate(x_mean, counts, actual_mode="max", tile_b=TILE_B)
    ref_mean = jnp.sum(x_mean, axis=1) / counts
    ref_max = jnp.max(x_mean, axis=1)

    # --- Bayesian mode (feature dim = 2F, interleaved mean/raw-cov pairs) ---
    x_bayes = jax.random.normal(k2, (B, N, 2 * F), dtype=jnp.float32)
    sigma_z_0_sq = jnp.ones((1, F), dtype=jnp.float32)   # nn.Parameter(th.ones(F))
    mean_z_0 = jnp.ones((1, F), dtype=jnp.float32)       # nn.Parameter(th.ones(F))
    out_bayes = bayesian_aggregate(x_bayes, sigma_z_0_sq, mean_z_0, tile_b=TILE_B)

    unf = x_bayes.reshape(B, N, F, 2)
    r_ref, cov_ref = unf[..., 0], jnp.exp(unf[..., 1])
    sig0 = jnp.exp(sigma_z_0_sq)
    sig_z = 1.0 / (1.0 / sig0 + jnp.sum(1.0 / cov_ref, axis=1))
    mean_z = mean_z_0 + sig_z * jnp.sum((r_ref - mean_z_0[:, None, :]) / cov_ref, axis=1)
    ref_bayes = jnp.concatenate([mean_z, sig_z], axis=-1)

    # --- MultiHeadAttention mode ---
    x_mha = jax.random.normal(k3, (B, N, F), dtype=jnp.float32)
    w_in = jax.random.normal(k4, (3 * F, F), dtype=jnp.float32) / math.sqrt(F)
    b_in = jnp.zeros((1, 3 * F), dtype=jnp.float32)
    w_out = jax.random.normal(k5, (F, F), dtype=jnp.float32) / math.sqrt(F)
    b_out = jnp.zeros((1, F), dtype=jnp.float32)
    # TODO(synk): nn.MultiheadAttention dropout has no eval-time effect (p=0 here).
    out_mha = mha_aggregate(x_mha, counts, w_in, b_in, w_out, b_out,
                            num_heads=H, tile_b=TILE_B)

    # pure-JAX MHA reference
    Dh = F // H
    qkv = x_mha @ w_in.T + b_in
    q, k_, v = qkv[..., :F], qkv[..., F:2 * F], qkv[..., 2 * F:]
    q = q.reshape(B, N, H, Dh)
    k_ = k_.reshape(B, N, H, Dh)
    v = v.reshape(B, N, H, Dh)
    s = jnp.einsum('bnhd,bmhd->bhnm', q, k_) / math.sqrt(Dh)
    p = jax.nn.softmax(s, axis=-1)
    attn = jnp.einsum('bhnm,bmhd->bnhd', p, v).reshape(B, N, F)
    attn = attn @ w_out.T + b_out + x_mha
    ref_mha = jnp.sum(attn, axis=1) / counts

    jax.block_until_ready((out_mean, out_max, out_bayes, out_mha))
    assert out_mean.shape == (B, F)
    assert out_max.shape == (B, F)
    assert out_bayes.shape == (B, 2 * F)
    assert out_mha.shape == (B, F)
    # loose tolerances: approx (EUP) reciprocals have ~2^-12 relative error
    assert jnp.allclose(out_mean, ref_mean, rtol=1e-2, atol=1e-2)
    assert jnp.allclose(out_max, ref_max, rtol=1e-2, atol=1e-2)
    assert jnp.allclose(out_bayes, ref_bayes, rtol=1e-2, atol=1e-2)
    assert jnp.allclose(out_mha, ref_mha, rtol=1e-2, atol=1e-2)
    print("KERNEL_OK")
</pallas_src>

<mosaic_0001>
module attributes {stable_mosaic.version = 11 : i64} {
  func.func @kernel(%arg0: i32, %arg1: memref<8x8x32xf32, #tpu.memory_space<vmem>>, %arg2: memref<8x1xf32, #tpu.memory_space<vmem>>, %arg3: memref<8x32xf32, #tpu.memory_space<vmem>>) attributes {dimension_semantics = [#tpu.dimension_semantics<parallel>], iteration_bounds = array<i64: 2>, scalar_prefetch = 0 : i64, scratch_operands = 0 : i64, tpu.core_type = #tpu.core_type<tc>, window_params = [{transform_indices = @transform_0, window_bounds = array<i64: 8, 8, 32>}, {transform_indices = @transform_1, window_bounds = array<i64: 8, 1>}, {transform_indices = @transform_2, window_bounds = array<i64: 8, 32>}]} {
    %c0 = arith.constant 0 : index
    %c0_0 = arith.constant 0 : index
    %c0_1 = arith.constant 0 : index
    %0 = vector.load %arg1[%c0, %c0_0, %c0_1] : memref<8x8x32xf32, #tpu.memory_space<vmem>>, vector<8x8x32xf32>
    %cst = arith.constant dense<0.000000e+00> : vector<8x32xf32>
    %1 = vector.multi_reduction <add>, %0, %cst [1] : vector<8x8x32xf32> to vector<8x32xf32>
    %c0_2 = arith.constant 0 : index
    %c0_3 = arith.constant 0 : index
    %2 = vector.load %arg2[%c0_2, %c0_3] : memref<8x1xf32, #tpu.memory_space<vmem>>, vector<8x1xf32>
    %3 = tpu.reciprocal %2 {approx = true} : vector<8x1xf32> -> vector<8x1xf32>
    %4 = vector.broadcast %3 : vector<8x1xf32> to vector<8x32xf32>
    %5 = arith.mulf %1, %4 : vector<8x32xf32>
    %c0_4 = arith.constant 0 : index
    %c0_5 = arith.constant 0 : index
    %6 = vector.load %arg3[%c0_4, %c0_5] : memref<8x32xf32, #tpu.memory_space<vmem>>, vector<8x32xf32>
    tpu.vector_store %arg3[%c0_4, %c0_5], %5 {strides = array<i32>} : memref<8x32xf32, #tpu.memory_space<vmem>>, vector<8x32xf32>,
    return
  }
  func.func @transform_0(%arg0: i32) -> (i32, i32, i32) {
    %c0_i32 = arith.constant 0 : i32
    %c0_i32_0 = arith.constant 0 : i32
    %c0_i32_1 = arith.constant 0 : i32
    return %arg0, %c0_i32, %c0_i32_0 : i32, i32, i32
  }
  func.func @transform_1(%arg0: i32) -> (i32, i32) {
    %c0_i32 = arith.constant 0 : i32
    %c0_i32_0 = arith.constant 0 : i32
    return %arg0, %c0_i32 : i32, i32
  }
  func.func @transform_2(%arg0: i32) -> (i32, i32) {
    %c0_i32 = arith.constant 0 : i32
    %c0_i32_0 = arith.constant 0 : i32
    return %arg0, %c0_i32 : i32, i32
  }
}

</mosaic_0001>

<llo_original>
// kernel: tpu_custom_call.1
$region0: #{tpu_custom_call.1}
  #allocation0 [shape = 'u32[]', space=smem, size = 0x4, offset = 0x4, fixed_abs, tag = 'smem constant byte address 0x4 - core index']
  #allocation1 [shape = 'u32[144,128]{1,0:T(1,128)}', space=vmem, size = 0x12000, scoped, tag = 'internal scratch']
  %s0 = inlined_call_operand.hbm [shape: f32[16,8,32], index: 0, kind: input, shape index: {}]
  %s1 = inlined_call_operand.vmem [shape: f32[16,1], index: 1, kind: input, shape index: {}]
  %s2 = inlined_call_operand.hbm [shape: f32[16,32], index: 2, kind: output, shape index: {}]
  %s3 = sld [smem:[#allocation0]]
  $region45: #{tpu_custom_call.1} parent=0
    _
  %s5 = ssub.s32 1, %s3
  %s6 = scalar_select 0, %s5, %s3
  $region1: #{tpu_custom_call.1} parent=0
    #allocation2 [shape = 'u8[65536]{0}', space=vmem, size = 0x10000, scoped, tag = 'input window, operand 0']
    #allocation3 [shape = 's32[2]{0}', space=sflag, size = 0x8, scoped, tag = 'scoped memory for tpu_custom_call.1']
    #allocation4 [shape = 's32[2]{0}', space=sflag, size = 0x8, scoped, tag = 'scoped memory for tpu_custom_call.1']
    #allocation5 [shape = 'u8[8192]{0}', space=vmem, size = 0x2000, scoped, tag = 'output window, operand 0']
    %7 = vsyncpa [#allocation3], 0
    %s8 = scalar_lea.sflag [#allocation3], 1
    %9 = vsyncpa %s8, 0
    %10 = vsyncpa [#allocation4], 0
    %s11 = scalar_lea.sflag [#allocation4], 1
    %12 = vsyncpa %s11, 0
    loop: start=0, step=1, limit=4
    $region2: #{tpu_custom_call.1} parent=1 // loop_pre_header
      _
    $region3: #{tpu_custom_call.1} parent=1 // loop_header
      %s14 = sphi 0, %s18
      %p15 = scmp.ge.s32.totalorder %s14, 4
      %s24 = sphi 0, %s26
      %s27 = sphi 0, %s24
      %s28 = sphi 0, %s27
      %s44 = sphi 0, %s28
      %s50 = sphi 0, %s52
      %s53 = sphi 0, %s50
      %s54 = sphi 0, %s53
      %s70 = sphi 0, %s54
      %s76 = sphi 0, %s78
      %s79 = sphi 0, %s76
      %s80 = sphi 0, %s79
      %s96 = sphi 0, %s80
    $region4: #{tpu_custom_call.1} parent=1 // loop_header_branch
      %17 = sbr.rel (%p15) target = $region8
    $region5: #{tpu_custom_call.1} parent=1 // loop_body
      %s19 = ssub.s32 %s14, 1
      %s20 = ssub.s32 %s14, 2
      %s21 = sadd.s32 %s14, 1
      %s22 = ssub.s32 %s14, %s21
      %p23 = scmp.eq.s32.totalorder %s22, 0
      %s25 = sadd.s32 %s24, 1
      %s26 = scalar_select %p23, %s24, %s25
      %p29 = pneg %p23
      %p30 = scmp.eq.s32.totalorder %s14, 1
      %p31 = por %p29, %p30
      %p32 = scmp.ne.s32.totalorder %s24, %s27
      %p33 = scmp.eq.s32.totalorder %s14, 0
      %p34 = por %p32, %p33
      %p35 = scmp.ne.s32.totalorder %s24, %s27
      %p36 = scmp.eq.s32.totalorder %s19, 1
      %p37 = por %p35, %p36
      %p38 = scmp.ne.s32.totalorder %s27, %s28
      %p39 = scmp.eq.s32.totalorder %s19, 0
      %p40 = por %p38, %p39
      %p41 = scmp.ne.s32.totalorder %s27, %s28
      %p42 = scmp.eq.s32.totalorder %s20, 1
      %p43 = por %p41, %p42
      %p45 = scmp.ne.s32.totalorder %s28, %s44
      %p46 = scmp.eq.s32.totalorder %s20, 0
      %p47 = por %p45, %p46
      %s48 = ssub.s32 %s14, %s21
      %p49 = scmp.eq.s32.totalorder %s48, 0
      %s51 = sadd.s32 %s50, 1
      %s52 = scalar_select %p49, %s50, %s51
      %p55 = pneg %p49
      %p56 = scmp.eq.s32.totalorder %s14, 1
      %p57 = por %p55, %p56
      %p58 = scmp.ne.s32.totalorder %s50, %s53
      %p59 = scmp.eq.s32.totalorder %s14, 0
      %p60 = por %p58, %p59
      %p61 = scmp.ne.s32.totalorder %s50, %s53
      %p62 = scmp.eq.s32.totalorder %s19, 1
      %p63 = por %p61, %p62
      %p64 = scmp.ne.s32.totalorder %s53, %s54
      %p65 = scmp.eq.s32.totalorder %s19, 0
      %p66 = por %p64, %p65
      %p67 = scmp.ne.s32.totalorder %s53, %s54
      %p68 = scmp.eq.s32.totalorder %s20, 1
      %p69 = por %p67, %p68
      %p71 = scmp.ne.s32.totalorder %s54, %s70
      %p72 = scmp.eq.s32.totalorder %s20, 0
      %p73 = por %p71, %p72
      %s74 = ssub.s32 %s14, %s21
      %p75 = scmp.eq.s32.totalorder %s74, 0
      %s77 = sadd.s32 %s76, 1
      %s78 = scalar_select %p75, %s76, %s77
      %p81 = pneg %p75
      %p82 = scmp.eq.s32.totalorder %s14, 1
      %p83 = por %p81, %p82
      %p84 = scmp.ne.s32.totalorder %s76, %s79
      %p85 = scmp.eq.s32.totalorder %s14, 0
      %p86 = por %p84, %p85
      %p87 = scmp.ne.s32.totalorder %s76, %s79
      %p88 = scmp.eq.s32.totalorder %s19, 1
      %p89 = por %p87, %p88
      %p90 = scmp.ne.s32.totalorder %s79, %s80
      %p91 = scmp.eq.s32.totalorder %s19, 0
      %p92 = por %p90, %p91
      %p93 = scmp.ne.s32.totalorder %s79, %s80
      %p94 = scmp.eq.s32.totalorder %s20, 1
      %p95 = por %p93, %p94
      %p97 = scmp.ne.s32.totalorder %s80, %s96
      %p98 = scmp.eq.s32.totalorder %s20, 0
      %p99 = por %p97, %p98
      %p100 = scmp.le.s32.totalorder 1, %s14
      %p101 = scmp.lt.s32.totalorder %s14, 3
      %p102 = pnand %p100, %p101
      %p103 = pneg %p102
      // Predicated region
      $region9: #{tpu_custom_call.1} parent=5 // pred_check
        _
      $region10: #{tpu_custom_call.1} parent=5 // pred_check_branch
        %105 = sbr.rel (%p102) target = $region12
      $region11: #{tpu_custom_call.1} parent=5 // pred_region
        %s106 = ssub.s32 %s14, 1
      $region12: #{tpu_custom_call.1} parent=5 // pred_fallthru
        _
      %p107 = scmp.lt.s32.totalorder %s14, 2
      // Predicated region
      $region13: #{tpu_custom_call.1} parent=5 // pred_check
        %p108 = pneg %p107
      $region14: #{tpu_custom_call.1} parent=5 // pred_check_branch
        %110 = sbr.rel (%p108) target = $region16
      $region15: #{tpu_custom_call.1} parent=5 // pred_region
        // Predicated region
        $region17: #{tpu_custom_call.1} parent=15 // pred_check
          %p111 = pneg %p34
        $region18: #{tpu_custom_call.1} parent=15 // pred_check_branch
          %113 = sbr.rel (%p111) target = $region20
        $region19: #{tpu_custom_call.1} parent=15 // pred_region
          %s114 = sand.u32 %s24, 1
          %s115 = scalar_lea.sflag [#allocation3], %s114
          %s116 = sand.u32 %s24, 1
          %s117 = smul.addr %s116, 64
          %s118 = scalar_lea.vmem [#allocation2], %s117
          %s119 = smul.u32 8, %s14
          %s121 = ssub.s32 1024, 1024
          %122 = vsyncadd %s115, %s121
          %s123 = smul.addr %s119, 128
          %s124 = scalar_lea.hbm %s0, %s123
          %s125 = sshll.u32 %s118, 4
          %s126 = int_to_ptr.vmem [resolvable:$true] %s125
          %131 = dma.hbm_to_vmem [thread:$0]  %s124, 1024, %s126, %s115, 128, 128, 8
        $region20: #{tpu_custom_call.1} parent=15 // pred_fallthru
          _
        // Predicated region
        $region21: #{tpu_custom_call.1} parent=15 // pred_check
          %p132 = pneg %p60
        $region22: #{tpu_custom_call.1} parent=15 // pred_check_branch
          %134 = sbr.rel (%p132) target = $region24
        $region23: #{tpu_custom_call.1} parent=15 // pred_region
          %p135 = scmp.lt.s32.totalorder %s14, 1
          %s136 = scalar_select %p135, %s14, 1
          %s137 = smul.addr %s136, 8
          %s138 = scalar_lea.vmem %s1, %s137
        $region24: #{tpu_custom_call.1} parent=15 // pred_fallthru
          _
      $region16: #{tpu_custom_call.1} parent=5 // pred_fallthru
        _
      %p139 = scmp.le.s32.totalorder 1, %s14
      %p140 = scmp.lt.s32.totalorder %s14, 3
      %p141 = pnand %p139, %p140
      %p142 = pneg %p141
      // Predicated region
      $region25: #{tpu_custom_call.1} parent=5 // pred_check
        _
      $region26: #{tpu_custom_call.1} parent=5 // pred_check_branch
        %144 = sbr.rel (%p141) target = $region28
      $region27: #{tpu_custom_call.1} parent=5 // pred_region
        %s145 = ssub.s32 %s14, 1
        %s146 = sand.u32 %s27, 1
        %s147 = scalar_lea.sflag [#allocation3], %s146
        %s148 = sand.u32 %s27, 1
        %s149 = smul.addr %s148, 64
        %s150 = scalar_lea.vmem [#allocation2], %s149
        // Predicated region
        $region29: #{tpu_custom_call.1} parent=27 // pred_check
          %p151 = pneg %p40
        $region30: #{tpu_custom_call.1} parent=27 // pred_check_branch
          %153 = sbr.rel (%p151) target = $region32
        $region31: #{tpu_custom_call.1} parent=27 // pred_region
          %154 = dma.done %s147, 1024
        $region32: #{tpu_custom_call.1} parent=27 // pred_fallthru
          _
        %s155 = sand.u32 %s27, 1
        %s156 = scalar_lea.sflag [#allocation3], %s155
        %s157 = sand.u32 %s27, 1
        %s158 = smul.addr %s157, 64
        %s159 = scalar_lea.vmem [#allocation2], %s158
        %p160 = pneg %p40
        %p161 = pneg %p37
        %p162 = scmp.lt.s32.totalorder %s19, 1
        %s163 = scalar_select %p162, %s19, 1
        %s164 = smul.addr %s163, 8
        %s165 = scalar_lea.vmem %s1, %s164
        %p166 = pneg %p66
        %p167 = pneg %p63
        %p168 = pneg %p92
        %p169 = pneg %p89
        %s170 = sand.u32 %s79, 1
        %s171 = scalar_lea.sflag [#allocation4], %s170
        %s172 = sand.u32 %s79, 1
        %s173 = smul.addr %s172, 8
        %s174 = scalar_lea.vmem [#allocation5], %s173
        %s175 = smul.u32 8, %s19
        %p176 = scmp.lt.s32.totalorder %s19, 1
        %s177 = scalar_select %p176, %s19, 1
        %s178 = smul.addr %s177, 8
        %s179 = scalar_lea.vmem %s1, %s178
        %v180 = vld [vmem:[%s150] sm:$0xff]
        %v181 = vld [vmem:[%s150 + $0x8] sm:$0xff]
        %v182 = vld [vmem:[%s150 + $0x10] sm:$0xff]
        %v183 = vld [vmem:[%s150 + $0x18] sm:$0xff]
        %v184 = vld [vmem:[%s150 + $0x20] sm:$0xff]
        %v185 = vld [vmem:[%s150 + $0x28] sm:$0xff]
        %v186 = vld [vmem:[%s150 + $0x30] sm:$0xff]
        %v187 = vld [vmem:[%s150 + $0x38] sm:$0xff]
        %vm188 = vcmask 261120
        %v189 = vsel %vm188, %v180, 0.0
        %v190 = vrot.slane %v189, 4
        %v191 = vadd.f32 %v189, %v190
        %v192 = vrot.slane %v191, 2
        %v193 = vadd.f32 %v191, %v192
        %v194 = vrot.slane %v193, 1
        %v195 = vadd.f32 %v193, %v194
        %v196 = vsel %vm188, %v181, 0.0
        %v197 = vrot.slane %v196, 4
        %v198 = vadd.f32 %v196, %v197
        %v199 = vrot.slane %v198, 2
        %v200 = vadd.f32 %v198, %v199
        %v201 = vrot.slane %v200, 1
        %v202 = vadd.f32 %v200, %v201
        %v203 = vsel %vm188, %v182, 0.0
        %v204 = vrot.slane %v203, 4
        %v205 = vadd.f32 %v203, %v204
        %v206 = vrot.slane %v205, 2
        %v207 = vadd.f32 %v205, %v206
        %v208 = vrot.slane %v207, 1
        %v209 = vadd.f32 %v207, %v208
        %v210 = vsel %vm188, %v183, 0.0
        %v211 = vrot.slane %v210, 4
        %v212 = vadd.f32 %v210, %v211
        %v213 = vrot.slane %v212, 2
        %v214 = vadd.f32 %v212, %v213
        %v215 = vrot.slane %v214, 1
        %v216 = vadd.f32 %v214, %v215
        %v217 = vsel %vm188, %v184, 0.0
        %v218 = vrot.slane %v217, 4
        %v219 = vadd.f32 %v217, %v218
        %v220 = vrot.slane %v219, 2
        %v221 = vadd.f32 %v219, %v220
        %v222 = vrot.slane %v221, 1
        %v223 = vadd.f32 %v221, %v222
        %v224 = vsel %vm188, %v185, 0.0
        %v225 = vrot.slane %v224, 4
        %v226 = vadd.f32 %v224, %v225
        %v227 = vrot.slane %v226, 2
        %v228 = vadd.f32 %v226, %v227
        %v229 = vrot.slane %v228, 1
        %v230 = vadd.f32 %v228, %v229
        %v231 = vsel %vm188, %v186, 0.0
        %v232 = vrot.slane %v231, 4
        %v233 = vadd.f32 %v231, %v232
        %v234 = vrot.slane %v233, 2
        %v235 = vadd.f32 %v233, %v234
        %v236 = vrot.slane %v235, 1
        %v237 = vadd.f32 %v235, %v236
        %v238 = vsel %vm188, %v187, 0.0
        %v239 = vrot.slane %v238, 4
        %v240 = vadd.f32 %v238, %v239
        %v241 = vrot.slane %v240, 2
        %v242 = vadd.f32 %v240, %v241
        %v243 = vrot.slane %v242, 1
        %v244 = vadd.f32 %v242, %v243
        %v245 = vld [vmem:[%s179] sm:$0xff]
        %v246 = vrcp.pop %v245
        %248 = vset.pattern.permute.xlu0 0
        %249 = vperm.xlu0 %248, %v246
        %v250 = vpop.permute.xlu0 %249
        %v251 = vrot.slane %v250, 1
        %v252 = vrot.slane %v250, 2
        %v253 = vrot.slane %v250, 3
        %v254 = vrot.slane %v250, 4
        %v255 = vrot.slane %v250, 5
        %v256 = vrot.slane %v250, 6
        %v257 = vrot.slane %v250, 7
        %v266 = vmul.f32 %v195, %v250
        %v267 = vmul.f32 %v202, %v251
        %v268 = vmul.f32 %v209, %v252
        %v269 = vmul.f32 %v216, %v253
        %v270 = vmul.f32 %v223, %v254
        %v271 = vmul.f32 %v230, %v255
        %v272 = vmul.f32 %v237, %v256
        %v273 = vmul.f32 %v244, %v257
        %v282 = vrot.slane %v267, 7
        %vm283 = vcmask 1041409
        %v284 = vsel %vm283, %v282, %v266
        %v285 = vrot.slane %v268, 6
        %vm286 = vcmask 1042434
        %v287 = vsel %vm286, %v285, %v284
        %v288 = vrot.slane %v269, 5
        %vm289 = vcmask 1043459
        %v290 = vsel %vm289, %v288, %v287
        %v291 = vrot.slane %v270, 4
        %vm292 = vcmask 1044484
        %v293 = vsel %vm292, %v291, %v290
        %v294 = vrot.slane %v271, 3
        %vm295 = vcmask 1045509
        %v296 = vsel %vm295, %v294, %v293
        %v297 = vrot.slane %v272, 2
        %vm298 = vcmask 1046534
        %v299 = vsel %vm298, %v297, %v296
        %v300 = vrot.slane %v273, 1
        %vm301 = vcmask 1047559
        %v302 = vsel %vm301, %v300, %v299
        %304 = vst.msk [vmem:[%s174] sm:$0xff] %vm188, %v302
        %s305 = sand.u32 %s79, 1
        %s306 = scalar_lea.sflag [#allocation4], %s305
        %s307 = sand.u32 %s79, 1
        %s308 = smul.addr %s307, 8
        %s309 = scalar_lea.vmem [#allocation5], %s308
        // Predicated region
        $region33: #{tpu_custom_call.1} parent=27 // pred_check
          %p310 = pneg %p89
        $region34: #{tpu_custom_call.1} parent=27 // pred_check_branch
          %312 = sbr.rel (%p310) target = $region36
        $region35: #{tpu_custom_call.1} parent=27 // pred_region
          %s314 = ssub.s32 128, 128
          %315 = vsyncadd %s306, %s314
          %s316 = smul.addr %s19, 128
          %s317 = scalar_lea.hbm %s2, %s316
          %s319 = sshll.u32 %s309, 4
          %s320 = int_to_ptr.vmem [resolvable:$true] %s319
          %322 = dma.vmem_to_hbm [thread:$0]  %s320, 128, %s317, %s306
        $region36: #{tpu_custom_call.1} parent=27 // pred_fallthru
          _
      $region28: #{tpu_custom_call.1} parent=5 // pred_fallthru
        _
      %p323 = scmp.le.s32.totalorder 2, %s14
      // Predicated region
      $region37: #{tpu_custom_call.1} parent=5 // pred_check
        %p324 = pneg %p323
      $region38: #{tpu_custom_call.1} parent=5 // pred_check_branch
        %326 = sbr.rel (%p324) target = $region40
      $region39: #{tpu_custom_call.1} parent=5 // pred_region
        %s327 = ssub.s32 %s14, 2
        // Predicated region
        $region41: #{tpu_custom_call.1} parent=39 // pred_check
          %p328 = pneg %p95
        $region42: #{tpu_custom_call.1} parent=39 // pred_check_branch
          %330 = sbr.rel (%p328) target = $region44
        $region43: #{tpu_custom_call.1} parent=39 // pred_region
          %s331 = sand.u32 %s80, 1
          %s332 = scalar_lea.sflag [#allocation4], %s331
          %s333 = sand.u32 %s80, 1
          %s334 = smul.addr %s333, 8
          %s335 = scalar_lea.vmem [#allocation5], %s334
          %336 = dma.done %s332, 128
        $region44: #{tpu_custom_call.1} parent=39 // pred_fallthru
          _
      $region40: #{tpu_custom_call.1} parent=5 // pred_fallthru
        _
    $region6: #{tpu_custom_call.1} parent=1 // loop_footer
      %s18 = sadd.s32 1, %s14
    $region7: #{tpu_custom_call.1} parent=1 // loop_footer_branch
      %13 = sbr.rel target = $region3
    $region8: #{tpu_custom_call.1} parent=1 // loop_exit
      _
    %337 = vsyncpa [#allocation3], 1
    %s338 = scalar_lea.sflag [#allocation3], 1
    %339 = vsyncpa %s338, 1
    %340 = vsyncpa [#allocation4], 1
    %s341 = scalar_lea.sflag [#allocation4], 1
    %342 = vsyncpa %s341, 1

</llo_original>
